<compile_context>
chip_gen: v6e
topology: v6e:2x2x1
jax: 0.10.0
libtpu: 0.0.40
codegen_flags: <defaults>
</compile_context>

<pallas_src>
import jax
import jax.numpy as jnp
from jax.experimental import pallas as pl
from jax.experimental.pallas import tpu as pltpu


def nonad_kernel(sig_ref, vid_ref, len_ref, noise_ref, out_ref):
    # sig_ref  : SMEM (2,)            f32  [sig_shot, sig_read]
    # vid_ref  : VMEM (1, T, Rb, 128) f32  video tile
    # len_ref  : VMEM (Rb, 128)       f32  exposure lengths (1..T valid, 0 = padding)
    # noise_ref: VMEM (1, 2, Rb, 128) f32  Gaussian noise (shot, read)
    # out_ref  : VMEM (1, Rb, 128)    f32
    T = vid_ref.shape[1]
    lengths = len_ref[...]                                        # (Rb, 128)

    # measurement = sum_t video[t] * shutter[t], shutter[t] = (t < lengths).
    # Unrolled over the small T, on sublane-dense (Rb, 128) slices.
    acc = jnp.where(lengths > 0.0, vid_ref[0, 0], 0.0)
    for t in range(1, T):
        acc = acc + jnp.where(lengths > float(t), vid_ref[0, t], 0.0)

    # (measurement / lengths) * (lengths / 8) == measurement / 8; the sqrt in
    # add_noise is taken of this post-ratio image (img is rebound first).
    img = acc * 0.125

    sig_shot = sig_ref[0]
    sig_read = sig_ref[1]
    shot = jnp.sqrt(img) * sig_shot * noise_ref[0, 0]
    read = sig_read * noise_ref[0, 1]

    out_ref[0] = jnp.clip(img + shot + read, 0.0, 1.0).astype(out_ref.dtype)


def nonad_forward(video_block, lengths, sigs, noise, *, target_rows=512):
    """Nonad forward.

    video_block: (B, T, H, W) f32
    lengths    : (H, W)       f32   per-pixel exposure length in [1, T]
    sigs       : (2,)         f32   [sig_shot, sig_read]
    noise      : (B, 2, H, W) f32   standard-normal draws (shot, read)
    returns    : (B, 1, H, W) f32
    """
    B, T, H, W = video_block.shape
    assert lengths.shape == (H, W)
    assert noise.shape == (B, 2, H, W)
    HW = H * W

    # Sublane/lane-dense spatial layout: HW -> (Rp, 128) with Rp % Rb == 0.
    R = (HW + 127) // 128
    Rb = min(target_rows, R)             # target_rows is a multiple of 8
    Rp = ((R + Rb - 1) // Rb) * Rb
    HWp = Rp * 128
    pad = HWp - HW

    vid = video_block.reshape(B, T, HW)
    len_flat = lengths.reshape(HW).astype(jnp.float32)
    noi = noise.reshape(B, 2, HW)
    if pad:
        vid = jnp.pad(vid, ((0, 0), (0, 0), (0, pad)))
        len_flat = jnp.pad(len_flat, (0, pad))      # padded lengths = 0 -> empty mask
        noi = jnp.pad(noi, ((0, 0), (0, 0), (0, pad)))

    vid = vid.reshape(B, T, Rp, 128)
    len2d = len_flat.reshape(Rp, 128)
    noi = noi.reshape(B, 2, Rp, 128)

    out = pl.pallas_call(
        nonad_kernel,
        out_shape=jax.ShapeDtypeStruct((B, Rp, 128), jnp.float32),
        grid_spec=pltpu.PrefetchScalarGridSpec(
            num_scalar_prefetch=0,
            grid=(Rp // Rb, B),          # batch innermost: lengths tile fetched once
            in_specs=[                   # per spatial tile and reused across b.
                pl.BlockSpec(memory_space=pltpu.MemorySpace.SMEM),         # sigs (2,)
                pl.BlockSpec((1, T, Rb, 128), lambda r, b: (b, 0, r, 0)),  # video
                pl.BlockSpec((Rb, 128), lambda r, b: (r, 0)),              # lengths
                pl.BlockSpec((1, 2, Rb, 128), lambda r, b: (b, 0, r, 0)),  # noise
            ],
            out_specs=pl.BlockSpec((1, Rb, 128), lambda r, b: (b, r, 0)),
        ),
        compiler_params=pltpu.CompilerParams(
            dimension_semantics=("parallel", "parallel")),
    )(sigs, vid, len2d, noi)

    return out.reshape(B, HWp)[:, :HW].reshape(B, 1, H, W)


if __name__ == "__main__":
    # "Nonad" => 9 sub-exposures. Small synthetic shapes.
    B, T, H, W = 2, 9, 16, 16

    key = jax.random.PRNGKey(0)
    k_vid, k_sig1, k_sig2, k_noise = jax.random.split(key, 4)

    # TODO(synk): torch.load('nonad.pt') exposure-length template is replaced
    # by a deterministic synthetic pattern of integer lengths in [1, T].
    yy, xx = jnp.meshgrid(jnp.arange(H), jnp.arange(W), indexing="ij")
    lengths = ((yy * W + xx) % T + 1).astype(jnp.float32)                 # (H, W)

    video = jax.random.uniform(k_vid, (B, T, H, W), dtype=jnp.float32)

    # add_noise sigma parameters (train path, deterministic host-side keys).
    test = False
    sig_shot_min, sig_shot_max = 1e-4, 1e-2
    sig_read_min, sig_read_max = 1e-3, 3e-2
    if test:
        sig_shot = jnp.float32((sig_shot_max - sig_shot_min) / 2)
        sig_read = jnp.float32((sig_read_max - sig_read_min) / 2)
    else:
        sig_shot = ((sig_shot_min - sig_shot_max)
                    * jax.random.uniform(k_sig1, (), dtype=jnp.float32)
                    + sig_shot_max)
        sig_read = ((sig_read_min - sig_read_max)
                    * jax.random.uniform(k_sig2, (), dtype=jnp.float32)
                    + sig_read_max)
    sigs = jnp.stack([sig_shot, sig_read]).astype(jnp.float32)            # (2,)

    # Host-side standard-normal noise (stands in for torch.randn_like).
    noise = jax.random.normal(k_noise, (B, 2, H, W), dtype=jnp.float32)

    out = nonad_forward(video, lengths, sigs, noise)
    jax.block_until_ready(out)

    # Pure-JAX reference (exact: noise is an explicit input).
    shutter = (jnp.arange(T, dtype=jnp.float32)[None, :, None, None]
               < lengths[None, None, :, :]).astype(jnp.float32)           # (1,T,H,W)
    meas = jnp.sum(video * shutter, axis=1, keepdims=True)                # (B,1,H,W)
    meas = meas / lengths
    img = meas * (lengths / 8.0)
    ref = jnp.clip(img + jnp.sqrt(img) * sigs[0] * noise[:, 0:1]
                   + sigs[1] * noise[:, 1:2], 0.0, 1.0)

    assert out.shape == (B, 1, H, W) and out.dtype == jnp.float32
    assert bool(jnp.all(jnp.isfinite(out)))
    assert bool(jnp.all((out >= 0.0) & (out <= 1.0)))
    assert bool(jnp.allclose(out, ref, atol=2e-5, rtol=1e-5))

    print("KERNEL_OK")
</pallas_src>

<mosaic_0001>
module attributes {stable_mosaic.version = 11 : i64} {
  func.func @nonad_kernel(%arg0: i32, %arg1: i32, %arg2: memref<2xf32, #tpu.memory_space<smem>>, %arg3: memref<1x9x2x128xf32, #tpu.memory_space<vmem>>, %arg4: memref<2x128xf32, #tpu.memory_space<vmem>>, %arg5: memref<1x2x2x128xf32, #tpu.memory_space<vmem>>, %arg6: memref<1x2x128xf32, #tpu.memory_space<vmem>>) attributes {dimension_semantics = [#tpu.dimension_semantics<parallel>, #tpu.dimension_semantics<parallel>], iteration_bounds = array<i64: 1, 2>, scalar_prefetch = 0 : i64, scratch_operands = 0 : i64, tpu.core_type = #tpu.core_type<tc>, window_params = [{transform_indices = @transform_0, window_bounds = array<i64: 2>}, {transform_indices = @transform_1, window_bounds = array<i64: 1, 9, 2, 128>}, {transform_indices = @transform_2, window_bounds = array<i64: 2, 128>}, {transform_indices = @transform_3, window_bounds = array<i64: 1, 2, 2, 128>}, {transform_indices = @transform_4, window_bounds = array<i64: 1, 2, 128>}]} {
    %c0 = arith.constant 0 : index
    %c0_0 = arith.constant 0 : index
    %0 = vector.load %arg4[%c0, %c0_0] : memref<2x128xf32, #tpu.memory_space<vmem>>, vector<2x128xf32>
    %cst = arith.constant 0.000000e+00 : f32
    %1 = vector.broadcast %cst : f32 to vector<2x128xf32>
    %2 = arith.cmpf ogt, %0, %1 : vector<2x128xf32>
    %c0_1 = arith.constant 0 : index
    %c0_2 = arith.constant 0 : index
    %c0_3 = arith.constant 0 : index
    %c0_4 = arith.constant 0 : index
    %3 = vector.load %arg3[%c0_1, %c0_2, %c0_3, %c0_4] : memref<1x9x2x128xf32, #tpu.memory_space<vmem>>, vector<1x1x2x128xf32>
    %4 = vector.shape_cast %3 : vector<1x1x2x128xf32> to vector<2x128xf32>
    %cst_5 = arith.constant 0.000000e+00 : f32
    %5 = vector.broadcast %cst_5 : f32 to vector<2x128xf32>
    %6 = arith.select %2, %4, %5 : vector<2x128xi1>, vector<2x128xf32>
    %cst_6 = arith.constant 1.000000e+00 : f32
    %7 = vector.broadcast %cst_6 : f32 to vector<2x128xf32>
    %8 = arith.cmpf ogt, %0, %7 : vector<2x128xf32>
    %c0_7 = arith.constant 0 : index
    %c1 = arith.constant 1 : index
    %c0_8 = arith.constant 0 : index
    %c0_9 = arith.constant 0 : index
    %9 = vector.load %arg3[%c0_7, %c1, %c0_8, %c0_9] : memref<1x9x2x128xf32, #tpu.memory_space<vmem>>, vector<1x1x2x128xf32>
    %10 = vector.shape_cast %9 : vector<1x1x2x128xf32> to vector<2x128xf32>
    %cst_10 = arith.constant 0.000000e+00 : f32
    %11 = vector.broadcast %cst_10 : f32 to vector<2x128xf32>
    %12 = arith.select %8, %10, %11 : vector<2x128xi1>, vector<2x128xf32>
    %13 = arith.addf %6, %12 : vector<2x128xf32>
    %cst_11 = arith.constant 2.000000e+00 : f32
    %14 = vector.broadcast %cst_11 : f32 to vector<2x128xf32>
    %15 = arith.cmpf ogt, %0, %14 : vector<2x128xf32>
    %c0_12 = arith.constant 0 : index
    %c2 = arith.constant 2 : index
    %c0_13 = arith.constant 0 : index
    %c0_14 = arith.constant 0 : index
    %16 = vector.load %arg3[%c0_12, %c2, %c0_13, %c0_14] : memref<1x9x2x128xf32, #tpu.memory_space<vmem>>, vector<1x1x2x128xf32>
    %17 = vector.shape_cast %16 : vector<1x1x2x128xf32> to vector<2x128xf32>
    %cst_15 = arith.constant 0.000000e+00 : f32
    %18 = vector.broadcast %cst_15 : f32 to vector<2x128xf32>
    %19 = arith.select %15, %17, %18 : vector<2x128xi1>, vector<2x128xf32>
    %20 = arith.addf %13, %19 : vector<2x128xf32>
    %cst_16 = arith.constant 3.000000e+00 : f32
    %21 = vector.broadcast %cst_16 : f32 to vector<2x128xf32>
    %22 = arith.cmpf ogt, %0, %21 : vector<2x128xf32>
    %c0_17 = arith.constant 0 : index
    %c3 = arith.constant 3 : index
    %c0_18 = arith.constant 0 : index
    %c0_19 = arith.constant 0 : index
    %23 = vector.load %arg3[%c0_17, %c3, %c0_18, %c0_19] : memref<1x9x2x128xf32, #tpu.memory_space<vmem>>, vector<1x1x2x128xf32>
    %24 = vector.shape_cast %23 : vector<1x1x2x128xf32> to vector<2x128xf32>
    %cst_20 = arith.constant 0.000000e+00 : f32
    %25 = vector.broadcast %cst_20 : f32 to vector<2x128xf32>
    %26 = arith.select %22, %24, %25 : vector<2x128xi1>, vector<2x128xf32>
    %27 = arith.addf %20, %26 : vector<2x128xf32>
    %cst_21 = arith.constant 4.000000e+00 : f32
    %28 = vector.broadcast %cst_21 : f32 to vector<2x128xf32>
    %29 = arith.cmpf ogt, %0, %28 : vector<2x128xf32>
    %c0_22 = arith.constant 0 : index
    %c4 = arith.constant 4 : index
    %c0_23 = arith.constant 0 : index
    %c0_24 = arith.constant 0 : index
    %30 = vector.load %arg3[%c0_22, %c4, %c0_23, %c0_24] : memref<1x9x2x128xf32, #tpu.memory_space<vmem>>, vector<1x1x2x128xf32>
    %31 = vector.shape_cast %30 : vector<1x1x2x128xf32> to vector<2x128xf32>
    %cst_25 = arith.constant 0.000000e+00 : f32
    %32 = vector.broadcast %cst_25 : f32 to vector<2x128xf32>
    %33 = arith.select %29, %31, %32 : vector<2x128xi1>, vector<2x128xf32>
    %34 = arith.addf %27, %33 : vector<2x128xf32>
    %cst_26 = arith.constant 5.000000e+00 : f32
    %35 = vector.broadcast %cst_26 : f32 to vector<2x128xf32>
    %36 = arith.cmpf ogt, %0, %35 : vector<2x128xf32>
    %c0_27 = arith.constant 0 : index
    %c5 = arith.constant 5 : index
    %c0_28 = arith.constant 0 : index
    %c0_29 = arith.constant 0 : index
    %37 = vector.load %arg3[%c0_27, %c5, %c0_28, %c0_29] : memref<1x9x2x128xf32, #tpu.memory_space<vmem>>, vector<1x1x2x128xf32>
    %38 = vector.shape_cast %37 : vector<1x1x2x128xf32> to vector<2x128xf32>
    %cst_30 = arith.constant 0.000000e+00 : f32
    %39 = vector.broadcast %cst_30 : f32 to vector<2x128xf32>
    %40 = arith.select %36, %38, %39 : vector<2x128xi1>, vector<2x128xf32>
    %41 = arith.addf %34, %40 : vector<2x128xf32>
    %cst_31 = arith.constant 6.000000e+00 : f32
    %42 = vector.broadcast %cst_31 : f32 to vector<2x128xf32>
    %43 = arith.cmpf ogt, %0, %42 : vector<2x128xf32>
    %c0_32 = arith.constant 0 : index
    %c6 = arith.constant 6 : index
    %c0_33 = arith.constant 0 : index
    %c0_34 = arith.constant 0 : index
    %44 = vector.load %arg3[%c0_32, %c6, %c0_33, %c0_34] : memref<1x9x2x128xf32, #tpu.memory_space<vmem>>, vector<1x1x2x128xf32>
    %45 = vector.shape_cast %44 : vector<1x1x2x128xf32> to vector<2x128xf32>
    %cst_35 = arith.constant 0.000000e+00 : f32
    %46 = vector.broadcast %cst_35 : f32 to vector<2x128xf32>
    %47 = arith.select %43, %45, %46 : vector<2x128xi1>, vector<2x128xf32>
    %48 = arith.addf %41, %47 : vector<2x128xf32>
    %cst_36 = arith.constant 7.000000e+00 : f32
    %49 = vector.broadcast %cst_36 : f32 to vector<2x128xf32>
    %50 = arith.cmpf ogt, %0, %49 : vector<2x128xf32>
    %c0_37 = arith.constant 0 : index
    %c7 = arith.constant 7 : index
    %c0_38 = arith.constant 0 : index
    %c0_39 = arith.constant 0 : index
    %51 = vector.load %arg3[%c0_37, %c7, %c0_38, %c0_39] : memref<1x9x2x128xf32, #tpu.memory_space<vmem>>, vector<1x1x2x128xf32>
    %52 = vector.shape_cast %51 : vector<1x1x2x128xf32> to vector<2x128xf32>
    %cst_40 = arith.constant 0.000000e+00 : f32
    %53 = vector.broadcast %cst_40 : f32 to vector<2x128xf32>
    %54 = arith.select %50, %52, %53 : vector<2x128xi1>, vector<2x128xf32>
    %55 = arith.addf %48, %54 : vector<2x128xf32>
    %cst_41 = arith.constant 8.000000e+00 : f32
    %56 = vector.broadcast %cst_41 : f32 to vector<2x128xf32>
    %57 = arith.cmpf ogt, %0, %56 : vector<2x128xf32>
    %c0_42 = arith.constant 0 : index
    %c8 = arith.constant 8 : index
    %c0_43 = arith.constant 0 : index
    %c0_44 = arith.constant 0 : index
    %58 = vector.load %arg3[%c0_42, %c8, %c0_43, %c0_44] : memref<1x9x2x128xf32, #tpu.memory_space<vmem>>, vector<1x1x2x128xf32>
    %59 = vector.shape_cast %58 : vector<1x1x2x128xf32> to vector<2x128xf32>
    %cst_45 = arith.constant 0.000000e+00 : f32
    %60 = vector.broadcast %cst_45 : f32 to vector<2x128xf32>
    %61 = arith.select %57, %59, %60 : vector<2x128xi1>, vector<2x128xf32>
    %62 = arith.addf %55, %61 : vector<2x128xf32>
    %cst_46 = arith.constant 1.250000e-01 : f32
    %63 = vector.broadcast %cst_46 : f32 to vector<2x128xf32>
    %64 = arith.mulf %62, %63 : vector<2x128xf32>
    %c0_47 = arith.constant 0 : index
    %65 = memref.load %arg2[%c0_47] : memref<2xf32, #tpu.memory_space<smem>>
    %c1_48 = arith.constant 1 : index
    %66 = memref.load %arg2[%c1_48] : memref<2xf32, #tpu.memory_space<smem>>
    %67 = math.sqrt %64 : vector<2x128xf32>
    %68 = vector.broadcast %65 : f32 to vector<2x128xf32>
    %69 = arith.mulf %67, %68 : vector<2x128xf32>
    %c0_49 = arith.constant 0 : index
    %c0_50 = arith.constant 0 : index
    %c0_51 = arith.constant 0 : index
    %c0_52 = arith.constant 0 : index
    %70 = vector.load %arg5[%c0_49, %c0_50, %c0_51, %c0_52] : memref<1x2x2x128xf32, #tpu.memory_space<vmem>>, vector<1x1x2x128xf32>
    %71 = vector.shape_cast %70 : vector<1x1x2x128xf32> to vector<2x128xf32>
    %72 = arith.mulf %69, %71 : vector<2x128xf32>
    %c0_53 = arith.constant 0 : index
    %c1_54 = arith.constant 1 : index
    %c0_55 = arith.constant 0 : index
    %c0_56 = arith.constant 0 : index
    %73 = vector.load %arg5[%c0_53, %c1_54, %c0_55, %c0_56] : memref<1x2x2x128xf32, #tpu.memory_space<vmem>>, vector<1x1x2x128xf32>
    %74 = vector.shape_cast %73 : vector<1x1x2x128xf32> to vector<2x128xf32>
    %75 = vector.broadcast %66 : f32 to vector<2x128xf32>
    %76 = arith.mulf %75, %74 : vector<2x128xf32>
    %77 = arith.addf %64, %72 : vector<2x128xf32>
    %78 = arith.addf %77, %76 : vector<2x128xf32>
    %cst_57 = arith.constant 0.000000e+00 : f32
    %cst_58 = arith.constant 1.000000e+00 : f32
    %79 = vector.broadcast %cst_57 : f32 to vector<2x128xf32>
    %80 = arith.maximumf %79, %78 : vector<2x128xf32>
    %81 = vector.broadcast %cst_58 : f32 to vector<2x128xf32>
    %82 = arith.minimumf %81, %80 : vector<2x128xf32>
    %c0_59 = arith.constant 0 : index
    %c0_60 = arith.constant 0 : index
    %c0_61 = arith.constant 0 : index
    %83 = vector.load %arg6[%c0_59, %c0_60, %c0_61] : memref<1x2x128xf32, #tpu.memory_space<vmem>>, vector<1x2x128xf32>
    %84 = vector.shape_cast %83 : vector<1x2x128xf32> to vector<2x128xf32>
    %85 = vector.shape_cast %82 : vector<2x128xf32> to vector<1x2x128xf32>
    tpu.vector_store %arg6[%c0_59, %c0_60, %c0_61], %85 {strides = array<i32>} : memref<1x2x128xf32, #tpu.memory_space<vmem>>, vector<1x2x128xf32>,
    return
  }
  func.func @transform_0(%arg0: i32, %arg1: i32) -> i32 {
    %c0_i32 = arith.constant 0 : i32
    %c0_i32_0 = arith.constant 0 : i32
    return %c0_i32 : i32
  }
  func.func @transform_1(%arg0: i32, %arg1: i32) -> (i32, i32, i32, i32) {
    %c0_i32 = arith.constant 0 : i32
    %c0_i32_0 = arith.constant 0 : i32
    %c0_i32_1 = arith.constant 0 : i32
    return %arg1, %c0_i32, %arg0, %c0_i32_0 : i32, i32, i32, i32
  }
  func.func @transform_2(%arg0: i32, %arg1: i32) -> (i32, i32) {
    %c0_i32 = arith.constant 0 : i32
    %c0_i32_0 = arith.constant 0 : i32
    return %arg0, %c0_i32 : i32, i32
  }
  func.func @transform_3(%arg0: i32, %arg1: i32) -> (i32, i32, i32, i32) {
    %c0_i32 = arith.constant 0 : i32
    %c0_i32_0 = arith.constant 0 : i32
    %c0_i32_1 = arith.constant 0 : i32
    return %arg1, %c0_i32, %arg0, %c0_i32_0 : i32, i32, i32, i32
  }
  func.func @transform_4(%arg0: i32, %arg1: i32) -> (i32, i32, i32) {
    %c0_i32 = arith.constant 0 : i32
    %c0_i32_0 = arith.constant 0 : i32
    return %arg1, %arg0, %c0_i32 : i32, i32, i32
  }
}

</mosaic_0001>

<llo_original>
// kernel: tpu_custom_call.1
$region0: #{tpu_custom_call.1}
  #allocation0 [shape = 'u32[]', space=smem, size = 0x4, offset = 0x4, fixed_abs, tag = 'smem constant byte address 0x4 - core index']
  #allocation1 [shape = 'u32[144,128]{1,0:T(1,128)}', space=vmem, size = 0x12000, scoped, tag = 'internal scratch']
  %s0 = inlined_call_operand.hbm [shape: f32[2], index: 0, kind: input, shape index: {}]
  %s1 = inlined_call_operand.hbm [shape: f32[2,9,2,128], index: 1, kind: input, shape index: {}]
  %s2 = inlined_call_operand.vmem [shape: f32[2,128], index: 2, kind: input, shape index: {}]
  %s3 = inlined_call_operand.hbm [shape: f32[2,2,2,128], index: 3, kind: input, shape index: {}]
  %s4 = inlined_call_operand.hbm [shape: f32[2,2,128], index: 4, kind: output, shape index: {}]
  %s5 = sld [smem:[#allocation0]]
  $region61: #{tpu_custom_call.1} parent=0
    _
  %s7 = ssub.s32 1, %s5
  %s8 = scalar_select 0, %s7, %s5
  $region1: #{tpu_custom_call.1} parent=0
    #allocation2 [shape = 'u8[512]{0}', space=smem, size = 0x200, scoped, tag = 'input window, operand 0, single buffered']
    #allocation3 [shape = 's32[2]{0}', space=sflag, size = 0x8, scoped, tag = 'scoped memory for tpu_custom_call.1']
    #allocation4 [shape = 's32[2]{0}', space=sflag, size = 0x8, scoped, tag = 'scoped memory for tpu_custom_call.1']
    #allocation5 [shape = 's32[2]{0}', space=sflag, size = 0x8, scoped, tag = 'scoped memory for tpu_custom_call.1']
    #allocation6 [shape = 'u8[18432]{0}', space=vmem, size = 0x4800, scoped, tag = 'input window, operand 1']
    #allocation7 [shape = 'u8[4096]{0}', space=vmem, size = 0x1000, scoped, tag = 'input window, operand 3']
    #allocation8 [shape = 's32[2]{0}', space=sflag, size = 0x8, scoped, tag = 'scoped memory for tpu_custom_call.1']
    #allocation9 [shape = 'u8[2048]{0}', space=vmem, size = 0x800, scoped, tag = 'output window, operand 0']
    %9 = vsyncpa [#allocation5], 0
    %10 = vsyncpa [#allocation3], 0
    %s11 = scalar_lea.sflag [#allocation3], 1
    %12 = vsyncpa %s11, 0
    %13 = vsyncpa [#allocation8], 0
    %s14 = scalar_lea.sflag [#allocation8], 1
    %15 = vsyncpa %s14, 0
    %16 = vsyncpa [#allocation4], 0
    %s17 = scalar_lea.sflag [#allocation4], 1
    %18 = vsyncpa %s17, 0
    loop: start=0, step=1, limit=4
    $region2: #{tpu_custom_call.1} parent=1 // loop_pre_header
      _
    $region3: #{tpu_custom_call.1} parent=1 // loop_header
      %s20 = sphi 0, %s24
      %p21 = scmp.ge.s32.totalorder %s20, 4
      %s27 = sphi 0, %s39
      %s28 = sphi 0, %s35
      %s29 = sphi 0, %s27
      %s30 = sphi 0, %s28
      %s31 = sphi 0, %s29
      %s32 = sphi 0, %s30
      %s40 = sphi 0, %s40
      %s42 = sphi 0, %s40
      %s43 = sphi 0, %s42
      %s57 = sphi 0, %s43
      %s65 = sphi 0, %s67
      %s68 = sphi 0, %s65
      %s69 = sphi 0, %s68
      %s85 = sphi 0, %s69
      %s91 = sphi 0, %s93
      %s94 = sphi 0, %s91
      %s95 = sphi 0, %s94
      %s111 = sphi 0, %s95
      %s119 = sphi 0, %s121
      %s122 = sphi 0, %s119
      %s123 = sphi 0, %s122
      %s139 = sphi 0, %s123
      %s147 = sphi 0, %s149
      %s150 = sphi 0, %s147
      %s151 = sphi 0, %s150
      %s167 = sphi 0, %s151
    $region4: #{tpu_custom_call.1} parent=1 // loop_header_branch
      %23 = sbr.rel (%p21) target = $region8
    $region5: #{tpu_custom_call.1} parent=1 // loop_body
      %s25 = ssub.s32 %s20, 1
      %s26 = ssub.s32 %s20, 2
      %s33 = sadd.s32 1, %s28
      %p34 = scmp.ge.s32.totalorder %s33, 2
      %s35 = scalar_select %p34, 0, %s33
      %s36 = sadd.s32 1, %s27
      %s37 = scalar_select %p34, %s36, %s27
      %p38 = scmp.ge.s32.totalorder %s37, 1
      %s39 = scalar_select %p38, 0, %s37
      %s41 = sadd.s32 %s40, 1
      %p44 = scmp.eq.s32.totalorder %s20, 1
      %p45 = scmp.ne.s32.totalorder %s40, %s42
      %p46 = scmp.eq.s32.totalorder %s20, 0
      %p47 = por %p45, %p46
      %p48 = scmp.ne.s32.totalorder %s40, %s42
      %p49 = scmp.eq.s32.totalorder %s25, 1
      %p50 = por %p48, %p49
      %p51 = scmp.ne.s32.totalorder %s42, %s43
      %p52 = scmp.eq.s32.totalorder %s25, 0
      %p53 = por %p51, %p52
      %p54 = scmp.ne.s32.totalorder %s42, %s43
      %p55 = scmp.eq.s32.totalorder %s26, 1
      %p56 = por %p54, %p55
      %p58 = scmp.ne.s32.totalorder %s43, %s57
      %p59 = scmp.eq.s32.totalorder %s26, 0
      %p60 = por %p58, %p59
      %s61 = ssub.s32 %s28, %s35
      %s62 = ssub.s32 %s27, %s39
      %s63 = sor.u32 %s61, %s62
      %p64 = scmp.eq.s32.totalorder %s63, 0
      %s66 = sadd.s32 %s65, 1
      %s67 = scalar_select %p64, %s65, %s66
      %p70 = pneg %p64
      %p71 = scmp.eq.s32.totalorder %s20, 1
      %p72 = por %p70, %p71
      %p73 = scmp.ne.s32.totalorder %s65, %s68
      %p74 = scmp.eq.s32.totalorder %s20, 0
      %p75 = por %p73, %p74
      %p76 = scmp.ne.s32.totalorder %s65, %s68
      %p77 = scmp.eq.s32.totalorder %s25, 1
      %p78 = por %p76, %p77
      %p79 = scmp.ne.s32.totalorder %s68, %s69
      %p80 = scmp.eq.s32.totalorder %s25, 0
      %p81 = por %p79, %p80
      %p82 = scmp.ne.s32.totalorder %s68, %s69
      %p83 = scmp.eq.s32.totalorder %s26, 1
      %p84 = por %p82, %p83
      %p86 = scmp.ne.s32.totalorder %s69, %s85
      %p87 = scmp.eq.s32.totalorder %s26, 0
      %p88 = por %p86, %p87
      %s89 = ssub.s32 %s27, %s39
      %p90 = scmp.eq.s32.totalorder %s89, 0
      %s92 = sadd.s32 %s91, 1
      %s93 = scalar_select %p90, %s91, %s92
      %p96 = pneg %p90
      %p97 = scmp.eq.s32.totalorder %s20, 1
      %p98 = por %p96, %p97
      %p99 = scmp.ne.s32.totalorder %s91, %s94
      %p100 = scmp.eq.s32.totalorder %s20, 0
      %p101 = por %p99, %p100
      %p102 = scmp.ne.s32.totalorder %s91, %s94
      %p103 = scmp.eq.s32.totalorder %s25, 1
      %p104 = por %p102, %p103
      %p105 = scmp.ne.s32.totalorder %s94, %s95
      %p106 = scmp.eq.s32.totalorder %s25, 0
      %p107 = por %p105, %p106
      %p108 = scmp.ne.s32.totalorder %s94, %s95
      %p109 = scmp.eq.s32.totalorder %s26, 1
      %p110 = por %p108, %p109
      %p112 = scmp.ne.s32.totalorder %s95, %s111
      %p113 = scmp.eq.s32.totalorder %s26, 0
      %p114 = por %p112, %p113
      %s115 = ssub.s32 %s28, %s35
      %s116 = ssub.s32 %s27, %s39
      %s117 = sor.u32 %s115, %s116
      %p118 = scmp.eq.s32.totalorder %s117, 0
      %s120 = sadd.s32 %s119, 1
      %s121 = scalar_select %p118, %s119, %s120
      %p124 = pneg %p118
      %p125 = scmp.eq.s32.totalorder %s20, 1
      %p126 = por %p124, %p125
      %p127 = scmp.ne.s32.totalorder %s119, %s122
      %p128 = scmp.eq.s32.totalorder %s20, 0
      %p129 = por %p127, %p128
      %p130 = scmp.ne.s32.totalorder %s119, %s122
      %p131 = scmp.eq.s32.totalorder %s25, 1
      %p132 = por %p130, %p131
      %p133 = scmp.ne.s32.totalorder %s122, %s123
      %p134 = scmp.eq.s32.totalorder %s25, 0
      %p135 = por %p133, %p134
      %p136 = scmp.ne.s32.totalorder %s122, %s123
      %p137 = scmp.eq.s32.totalorder %s26, 1
      %p138 = por %p136, %p137
      %p140 = scmp.ne.s32.totalorder %s123, %s139
      %p141 = scmp.eq.s32.totalorder %s26, 0
      %p142 = por %p140, %p141
      %s143 = ssub.s32 %s28, %s35
      %s144 = ssub.s32 %s27, %s39
      %s145 = sor.u32 %s143, %s144
      %p146 = scmp.eq.s32.totalorder %s145, 0
      %s148 = sadd.s32 %s147, 1
      %s149 = scalar_select %p146, %s147, %s148
      %p152 = pneg %p146
      %p153 = scmp.eq.s32.totalorder %s20, 1
      %p154 = por %p152, %p153
      %p155 = scmp.ne.s32.totalorder %s147, %s150
      %p156 = scmp.eq.s32.totalorder %s20, 0
      %p157 = por %p155, %p156
      %p158 = scmp.ne.s32.totalorder %s147, %s150
      %p159 = scmp.eq.s32.totalorder %s25, 1
      %p160 = por %p158, %p159
      %p161 = scmp.ne.s32.totalorder %s150, %s151
      %p162 = scmp.eq.s32.totalorder %s25, 0
      %p163 = por %p161, %p162
      %p164 = scmp.ne.s32.totalorder %s150, %s151
      %p165 = scmp.eq.s32.totalorder %s26, 1
      %p166 = por %p164, %p165
      %p168 = scmp.ne.s32.totalorder %s151, %s167
      %p169 = scmp.eq.s32.totalorder %s26, 0
      %p170 = por %p168, %p169
      %p171 = scmp.le.s32.totalorder 1, %s20
      %p172 = scmp.lt.s32.totalorder %s20, 3
      %p173 = pnand %p171, %p172
      %p174 = pneg %p173
      // Predicated region
      $region9: #{tpu_custom_call.1} parent=5 // pred_check
        _
      $region10: #{tpu_custom_call.1} parent=5 // pred_check_branch
        %176 = sbr.rel (%p173) target = $region12
      $region11: #{tpu_custom_call.1} parent=5 // pred_region
        %s177 = ssub.s32 %s20, 1
        // Predicated region
        $region13: #{tpu_custom_call.1} parent=11 // pred_check
          %p178 = pneg %p53
        $region14: #{tpu_custom_call.1} parent=11 // pred_check_branch
          %180 = sbr.rel (%p178) target = $region16
        $region15: #{tpu_custom_call.1} parent=11 // pred_region
          %s182 = ssub.s32 16, 16
          %183 = vsyncadd [#allocation5], %s182
          %186 = dma.hbm_to_smem %s0, 16, [#allocation2], [#allocation5]
        $region16: #{tpu_custom_call.1} parent=11 // pred_fallthru
          _
        // Predicated region
        $region17: #{tpu_custom_call.1} parent=11 // pred_check
          %p187 = pneg %p107
        $region18: #{tpu_custom_call.1} parent=11 // pred_check_branch
          %189 = sbr.rel (%p187) target = $region20
        $region19: #{tpu_custom_call.1} parent=11 // pred_region
          %p190 = scmp.lt.s32.totalorder %s29, 0
          %s191 = scalar_select %p190, %s29, 0
          %s192 = smul.addr %s191, 2
          %s193 = scalar_lea.vmem %s2, %s192
        $region20: #{tpu_custom_call.1} parent=11 // pred_fallthru
          _
      $region12: #{tpu_custom_call.1} parent=5 // pred_fallthru
        _
      %p194 = scmp.lt.s32.totalorder %s20, 2
      // Predicated region
      $region21: #{tpu_custom_call.1} parent=5 // pred_check
        %p195 = pneg %p194
      $region22: #{tpu_custom_call.1} parent=5 // pred_check_branch
        %197 = sbr.rel (%p195) target = $region24
      $region23: #{tpu_custom_call.1} parent=5 // pred_region
        // Predicated region
        $region25: #{tpu_custom_call.1} parent=23 // pred_check
          %p198 = pneg %p75
        $region26: #{tpu_custom_call.1} parent=23 // pred_check_branch
          %200 = sbr.rel (%p198) target = $region28
        $region27: #{tpu_custom_call.1} parent=23 // pred_region
          %s201 = sand.u32 %s65, 1
          %s202 = scalar_lea.sflag [#allocation3], %s201
          %s203 = sand.u32 %s65, 1
          %s204 = smul.addr %s203, 18
          %s205 = scalar_lea.vmem [#allocation6], %s204
          %s207 = ssub.s32 288, 288
          %208 = vsyncadd %s202, %s207
          %s209 = smul.addr %s28, 9
          %s210 = sadd.s32 %s27, %s209
          %s211 = smul.addr %s210, 32
          %s212 = scalar_lea.hbm %s1, %s211
          %s213 = sshll.u32 %s205, 4
          %s214 = int_to_ptr.vmem [resolvable:$true] %s213
          %219 = dma.hbm_to_vmem [thread:$0]  %s212, 288, %s214, %s202, 32, 32, 2
        $region28: #{tpu_custom_call.1} parent=23 // pred_fallthru
          _
        // Predicated region
        $region29: #{tpu_custom_call.1} parent=23 // pred_check
          %p220 = pneg %p129
        $region30: #{tpu_custom_call.1} parent=23 // pred_check_branch
          %222 = sbr.rel (%p220) target = $region32
        $region31: #{tpu_custom_call.1} parent=23 // pred_region
          %s223 = sand.u32 %s119, 1
          %s224 = scalar_lea.sflag [#allocation8], %s223
          %s225 = sand.u32 %s119, 1
          %s226 = smul.addr %s225, 4
          %s227 = scalar_lea.vmem [#allocation7], %s226
          %s229 = ssub.s32 64, 64
          %230 = vsyncadd %s224, %s229
          %s231 = smul.addr %s28, 2
          %s232 = sadd.s32 %s27, %s231
          %s233 = smul.addr %s232, 32
          %s234 = scalar_lea.hbm %s3, %s233
          %s235 = sshll.u32 %s227, 4
          %s236 = int_to_ptr.vmem [resolvable:$true] %s235
          %241 = dma.hbm_to_vmem [thread:$0]  %s234, 64, %s236, %s224, 32, 32, 2
        $region32: #{tpu_custom_call.1} parent=23 // pred_fallthru
          _
      $region24: #{tpu_custom_call.1} parent=5 // pred_fallthru
        _
      %p242 = scmp.le.s32.totalorder 1, %s20
      %p243 = scmp.lt.s32.totalorder %s20, 3
      %p244 = pnand %p242, %p243
      %p245 = pneg %p244
      // Predicated region
      $region33: #{tpu_custom_call.1} parent=5 // pred_check
        _
      $region34: #{tpu_custom_call.1} parent=5 // pred_check_branch
        %247 = sbr.rel (%p244) target = $region36
      $region35: #{tpu_custom_call.1} parent=5 // pred_region
        %s248 = ssub.s32 %s20, 1
        // Predicated region
        $region37: #{tpu_custom_call.1} parent=35 // pred_check
          %p249 = pneg %p53
        $region38: #{tpu_custom_call.1} parent=35 // pred_check_branch
          %251 = sbr.rel (%p249) target = $region40
        $region39: #{tpu_custom_call.1} parent=35 // pred_region
          %252 = dma.done [#allocation5], 16
        $region40: #{tpu_custom_call.1} parent=35 // pred_fallthru
          _
        %s253 = sand.u32 %s68, 1
        %s254 = scalar_lea.sflag [#allocation3], %s253
        %s255 = sand.u32 %s68, 1
        %s256 = smul.addr %s255, 18
        %s257 = scalar_lea.vmem [#allocation6], %s256
        // Predicated region
        $region41: #{tpu_custom_call.1} parent=35 // pred_check
          %p258 = pneg %p81
        $region42: #{tpu_custom_call.1} parent=35 // pred_check_branch
          %260 = sbr.rel (%p258) target = $region44
        $region43: #{tpu_custom_call.1} parent=35 // pred_region
          %261 = dma.done %s254, 288
        $region44: #{tpu_custom_call.1} parent=35 // pred_fallthru
          _
        %s262 = sand.u32 %s122, 1
        %s263 = scalar_lea.sflag [#allocation8], %s262
        %s264 = sand.u32 %s122, 1
        %s265 = smul.addr %s264, 4
        %s266 = scalar_lea.vmem [#allocation7], %s265
        // Predicated region
        $region45: #{tpu_custom_call.1} parent=35 // pred_check
          %p267 = pneg %p135
        $region46: #{tpu_custom_call.1} parent=35 // pred_check_branch
          %269 = sbr.rel (%p267) target = $region48
        $region47: #{tpu_custom_call.1} parent=35 // pred_region
          %270 = dma.done %s263, 64
        $region48: #{tpu_custom_call.1} parent=35 // pred_fallthru
          _
        %271 = sfence
        %p272 = pneg %p53
        %p273 = pneg %p50
        %s274 = sand.u32 %s68, 1
        %s275 = scalar_lea.sflag [#allocation3], %s274
        %s276 = sand.u32 %s68, 1
        %s277 = smul.addr %s276, 18
        %s278 = scalar_lea.vmem [#allocation6], %s277
        %p279 = pneg %p81
        %p280 = pneg %p78
        %p281 = scmp.lt.s32.totalorder %s29, 0
        %s282 = scalar_select %p281, %s29, 0
        %s283 = smul.addr %s282, 2
        %s284 = scalar_lea.vmem %s2, %s283
        %p285 = pneg %p107
        %p286 = pneg %p104
        %s287 = sand.u32 %s122, 1
        %s288 = scalar_lea.sflag [#allocation8], %s287
        %s289 = sand.u32 %s122, 1
        %s290 = smul.addr %s289, 4
        %s291 = scalar_lea.vmem [#allocation7], %s290
        %p292 = pneg %p135
        %p293 = pneg %p132
        %p294 = pneg %p163
        %p295 = pneg %p160
        %s296 = sand.u32 %s150, 1
        %s297 = scalar_lea.sflag [#allocation4], %s296
        %s298 = sand.u32 %s150, 1
        %s299 = smul.addr %s298, 2
        %s300 = scalar_lea.vmem [#allocation9], %s299
        %p301 = scmp.lt.s32.totalorder %s29, 0
        %s302 = scalar_select %p301, %s29, 0
        %s303 = smul.addr %s302, 2
        %s304 = scalar_lea.vmem %s2, %s303
        %v305 = vld [vmem:[%s304] sm:$0x3]
        %vm306 = vcmp.gt.f32.partialorder %v305, 0.0
        %v307 = vld [vmem:[%s257] sm:$0x3]
        %v308 = vsel %vm306, %v307, 0.0
        %vm309 = vcmp.gt.f32.partialorder %v305, 1.0
        %s310 = scalar_lea.vmem %s257, 2 [#allocation6]
        %v311 = vld [vmem:[%s310] sm:$0x3]
        %v312 = vsel %vm309, %v311, 0.0
        %v313 = vadd.f32 %v308, %v312
        %vm314 = vcmp.gt.f32.partialorder %v305, 2.0
        %s315 = scalar_lea.vmem %s257, 4 [#allocation6]
        %v316 = vld [vmem:[%s315] sm:$0x3]
        %v317 = vsel %vm314, %v316, 0.0
        %v318 = vadd.f32 %v313, %v317
        %vm319 = vcmp.gt.f32.partialorder %v305, 3.0
        %s320 = scalar_lea.vmem %s257, 6 [#allocation6]
        %v321 = vld [vmem:[%s320] sm:$0x3]
        %v322 = vsel %vm319, %v321, 0.0
        %v323 = vadd.f32 %v318, %v322
        %vm324 = vcmp.gt.f32.partialorder %v305, 4.0
        %s325 = scalar_lea.vmem %s257, 8 [#allocation6]
        %v326 = vld [vmem:[%s325] sm:$0x3]
        %v327 = vsel %vm324, %v326, 0.0
        %v328 = vadd.f32 %v323, %v327
        %vm329 = vcmp.gt.f32.partialorder %v305, 5.0
        %s330 = scalar_lea.vmem %s257, 10 [#allocation6]
        %v331 = vld [vmem:[%s330] sm:$0x3]
        %v332 = vsel %vm329, %v331, 0.0
        %v333 = vadd.f32 %v328, %v332
        %vm334 = vcmp.gt.f32.partialorder %v305, 6.0
        %s335 = scalar_lea.vmem %s257, 12 [#allocation6]
        %v336 = vld [vmem:[%s335] sm:$0x3]
        %v337 = vsel %vm334, %v336, 0.0
        %v338 = vadd.f32 %v333, %v337
        %vm339 = vcmp.gt.f32.partialorder %v305, 7.0
        %s340 = scalar_lea.vmem %s257, 14 [#allocation6]
        %v341 = vld [vmem:[%s340] sm:$0x3]
        %v342 = vsel %vm339, %v341, 0.0
        %v343 = vadd.f32 %v338, %v342
        %vm344 = vcmp.gt.f32.partialorder %v305, 8.0
        %s345 = scalar_lea.vmem %s257, 16 [#allocation6]
        %v346 = vld [vmem:[%s345] sm:$0x3]
        %v347 = vsel %vm344, %v346, 0.0
        %v348 = vadd.f32 %v343, %v347
        %v349 = vmul.f32 %v348, 0.125
        %s350 = sld [smem:[#allocation2]]
        %s351 = sld [smem:[#allocation2 + $0x1]]
        %v352 = vrsqrt.pop %v349
        %v353 = vmul.f32 %v349, %v352
        %vm354 = vcmp.eq.f32.partialorder %v349, inf
        %v355 = vsel %vm354, %v349, %v353
        %vm356 = vcmp.eq.f32.partialorder %v349, 0.0
        %v357 = vand.u32 %v349, 2147483648
        %v358 = vsel %vm356, %v357, %v355
        %v359 = vstv %s350
        %v360 = vmul.f32 %v358, %v359
        %v361 = vld [vmem:[%s266] sm:$0x3]
        %v362 = vmul.f32 %v360, %v361
        %s363 = scalar_lea.vmem %s266, 2 [#allocation7]
        %v364 = vld [vmem:[%s363] sm:$0x3]
        %v365 = vstv %s351
        %v366 = vmul.f32 %v365, %v364
        %v367 = vadd.f32 %v349, %v362
        %v368 = vadd.f32 %v367, %v366
        %v369 = vmax.f32 %v368, 0.0
        %v370 = vmin.f32 %v369, 1.0
        %371 = vst [vmem:[%s300] sm:$0x3] %v370
        %s372 = sand.u32 %s150, 1
        %s373 = scalar_lea.sflag [#allocation4], %s372
        %s374 = sand.u32 %s150, 1
        %s375 = smul.addr %s374, 2
        %s376 = scalar_lea.vmem [#allocation9], %s375
        // Predicated region
        $region49: #{tpu_custom_call.1} parent=35 // pred_check
          %p377 = pneg %p160
        $region50: #{tpu_custom_call.1} parent=35 // pred_check_branch
          %379 = sbr.rel (%p377) target = $region52
        $region51: #{tpu_custom_call.1} parent=35 // pred_region
          %s381 = ssub.s32 32, 32
          %382 = vsyncadd %s373, %s381
          %s383 = sadd.s32 %s29, %s30
          %s384 = smul.addr %s383, 32
          %s385 = scalar_lea.hbm %s4, %s384
          %s387 = sshll.u32 %s376, 4
          %s388 = int_to_ptr.vmem [resolvable:$true] %s387
          %390 = dma.vmem_to_hbm [thread:$0]  %s388, 32, %s385, %s373
        $region52: #{tpu_custom_call.1} parent=35 // pred_fallthru
          _
      $region36: #{tpu_custom_call.1} parent=5 // pred_fallthru
        _
      %p391 = scmp.le.s32.totalorder 2, %s20
      // Predicated region
      $region53: #{tpu_custom_call.1} parent=5 // pred_check
        %p392 = pneg %p391
      $region54: #{tpu_custom_call.1} parent=5 // pred_check_branch
        %394 = sbr.rel (%p392) target = $region56
      $region55: #{tpu_custom_call.1} parent=5 // pred_region
        %s395 = ssub.s32 %s20, 2
        // Predicated region
        $region57: #{tpu_custom_call.1} parent=55 // pred_check
          %p396 = pneg %p166
        $region58: #{tpu_custom_call.1} parent=55 // pred_check_branch
          %398 = sbr.rel (%p396) target = $region60
        $region59: #{tpu_custom_call.1} parent=55 // pred_region
          %s399 = sand.u32 %s151, 1
          %s400 = scalar_lea.sflag [#allocation4], %s399
          %s401 = sand.u32 %s151, 1
          %s402 = smul.addr %s401, 2
          %s403 = scalar_lea.vmem [#allocation9], %s402
          %404 = dma.done %s400, 32
        $region60: #{tpu_custom_call.1} parent=55 // pred_fallthru
          _
      $region56: #{tpu_custom_call.1} parent=5 // pred_fallthru
        _
    $region6: #{tpu_custom_call.1} parent=1 // loop_footer
      %s24 = sadd.s32 1, %s20
    $region7: #{tpu_custom_call.1} parent=1 // loop_footer_branch
      %19 = sbr.rel target = $region3
    $region8: #{tpu_custom_call.1} parent=1 // loop_exit
      _
    %405 = vsyncpa [#allocation3], 1
    %s406 = scalar_lea.sflag [#allocation3], 1
    %407 = vsyncpa %s406, 1
    %408 = vsyncpa [#allocation8], 1
    %s409 = scalar_lea.sflag [#allocation8], 1
    %410 = vsyncpa %s409, 1
    %411 = vsyncpa [#allocation4], 1
    %s412 = scalar_lea.sflag [#allocation4], 1
    %413 = vsyncpa %s412, 1
    %414 = vsyncpa [#allocation5], 1
    %s415 = scalar_lea.sflag [#allocation5], 1
    %416 = vsyncpa %s415, 1

</llo_original>
